<compile_context>
chip_gen: v7x
topology: tpu7x:2x2x1
jax: 0.10.0
libtpu: 0.0.40
codegen_flags: <defaults>
</compile_context>

<pallas_src>
import functools

import jax
import jax.numpy as jnp
from jax.experimental import pallas as pl
from jax.experimental.pallas import tpu as pltpu


# --------------------------------------------------------------------------
# Fused kernel: evaluate(full) + evaluate(prefix) + forward() decision.
#   emb_ref   : (Bt, S, H) bf16  token embeddings for this batch tile
#   lens_ref  : (Bt, 1)  int32   valid-token count per row
#   labels_ref: (Bt, 1)  int32   ground-truth label per row
#   w_ref     : (H, Lp)  bf16    classifier weight (padded to lane-dense Lp)
#   b_ref     : (1, Lp)  f32     classifier bias (-1e30 on padded columns)
# output (single lane-dense slab)
#   out_ref   : (Bt, Lp) f32
#       cols [0, num_labels)  softmax scores of the ORIGINAL sentences
#       col num_labels + 0    argmax prediction
#       col num_labels + 1    origin score  probs_full[label]
#       col num_labels + 2    masked score  probs_prefix[label]
#       col num_labels + 3    decision (1.0 = add position to mask set)
# --------------------------------------------------------------------------
def asc_fused_kernel(emb_ref, lens_ref, labels_ref, w_ref, b_ref, out_ref,
                     *, prefix_len, threshold, num_labels):
    emb = emb_ref[...]                                   # (Bt, S, H) bf16
    lens = lens_ref[...]                                 # (Bt, 1) int32
    labels = labels_ref[...]                             # (Bt, 1) int32
    w = w_ref[...]                                       # (H, Lp)  bf16
    bias = b_ref[...]                                    # (1, Lp)  f32

    Bt, S, _ = emb.shape
    Lp = w.shape[1]

    # ---- masked mean pooling: VPU multiply + sublane reduce (no MXU, no
    # quadratic (Bt, Bt*S) temporaries).  f32 accumulation (bf16*f32 -> f32).
    pos = jax.lax.broadcasted_iota(jnp.int32, (Bt, S), 1)

    def pool(eff_len):
        # eff_len: (Bt,1) int32.  Guard empty rows (max(len,1)) — no NaN.
        inv_den = 1.0 / jnp.maximum(eff_len.astype(jnp.float32), 1.0)   # (Bt,1)
        mask = jnp.where(pos < eff_len, inv_den, 0.0)                   # (Bt,S) f32
        return jnp.sum(emb * mask[:, :, None], axis=1)                  # (Bt,H) f32

    pooled_f = pool(lens)
    pooled_m = pool(jnp.minimum(lens, jnp.int32(prefix_len)))

    # ---- single classifier matmul for BOTH variants (fills MXU M dimension).
    # bf16 operands, f32 accumulation; bias/softmax stay f32.
    pooled = jnp.concatenate([pooled_f, pooled_m], axis=0)              # (2Bt, H)
    logits = jnp.dot(pooled.astype(w.dtype), w,
                     preferred_element_type=jnp.float32) + bias         # (2Bt, Lp)

    # Numerically stable softmax pieces, shared across both halves.
    mx = jnp.max(logits, axis=1, keepdims=True)
    e = jnp.exp(logits - mx)
    den = jnp.sum(e, axis=1, keepdims=True)

    logits_f, mx_f = logits[:Bt], mx[:Bt]
    e_f, den_f = e[:Bt], den[:Bt]
    e_m, den_m = e[Bt:], den[Bt:]

    # Full softmax scores only for the unmasked variant (what evaluate() returns).
    # Exact reciprocal: keeps the near-threshold decision bit-stable.
    probs_f = e_f * pl.reciprocal(den_f, approx=False)                  # (Bt, Lp)

    col = jax.lax.broadcasted_iota(jnp.int32, (Bt, Lp), 1)

    # argmax(dim=1): first maximum wins (matches np.argmax).
    preds = jnp.min(jnp.where(logits_f >= mx_f, col, jnp.int32(Lp)),
                    axis=1, keepdims=True)                              # (Bt,1) int32

    # probs[b, label[b]] via iota compare (no one-hot DMA).  The masked variant
    # never materializes its full prob row: numerator * 1/denominator only.
    label_sel = col == labels
    score_f = jnp.sum(jnp.where(label_sel, probs_f, 0.0), axis=1, keepdims=True)
    score_m = (jnp.sum(jnp.where(label_sel, e_m, 0.0), axis=1, keepdims=True)
               * pl.reciprocal(den_m, approx=False))

    # forward() decision, fused:
    #   keep = (pred == label)  AND  (origin_score - masked_score < threshold)
    right = preds == labels
    drop = (score_f - score_m) < jnp.float32(threshold)
    decision = jnp.logical_and(right, drop).astype(jnp.float32)

    # ---- pack everything into ONE lane-dense slab: real probs in the first
    # num_labels lanes, the four per-row scalars in the dead padded lanes.
    c0 = num_labels
    out = jnp.where(col < num_labels, probs_f, 0.0)
    out = out + jnp.where(col == c0, preds.astype(jnp.float32), 0.0)
    out = out + jnp.where(col == c0 + 1, score_f, 0.0)
    out = out + jnp.where(col == c0 + 2, score_m, 0.0)
    out = out + jnp.where(col == c0 + 3, decision, 0.0)
    out_ref[...] = out


def asc_forward(emb, lengths, labels, w, b, *, prefix_len, threshold,
                num_labels, b_tile=8):
    """Fused evaluate(full) + evaluate(prefix) + mask decision."""
    B, S, H = emb.shape
    Lp = w.shape[1]
    assert num_labels + 4 <= Lp, "need 4 free padded lanes for packed stats"

    # Ragged batches: pad with zero-length rows (finite thanks to the
    # max(len,1) guard) and slice the padding off the output.
    B_pad = ((B + b_tile - 1) // b_tile) * b_tile
    if B_pad != B:
        pad = B_pad - B
        emb = jnp.concatenate([emb, jnp.zeros((pad, S, H), emb.dtype)], axis=0)
        lengths = jnp.concatenate([lengths, jnp.zeros((pad,), lengths.dtype)])
        labels = jnp.concatenate([labels, jnp.zeros((pad,), labels.dtype)])

    # bf16 operands for the dominant HBM traffic / MXU; f32 accumulation and
    # f32 softmax stay inside the kernel.
    emb_bf = emb.astype(jnp.bfloat16)
    w_bf = w.astype(jnp.bfloat16)
    lens2d = lengths.reshape(B_pad, 1).astype(jnp.int32)
    labels2d = labels.reshape(B_pad, 1).astype(jnp.int32)

    kern = functools.partial(asc_fused_kernel,
                             prefix_len=int(prefix_len),
                             threshold=float(threshold),
                             num_labels=int(num_labels))

    # NOTE: at BERT scale, re-derive b_tile and vmem_limit_bytes per chip
    # generation (v7x: 64 MiB physical / 32 MiB default scoped; keep >= 2 grid
    # tiles for its 2 TensorCores).  w/b are grid-invariant; their default
    # double-buffering is accepted here since they are tiny at this Lp/H.
    out = pl.pallas_call(
        kern,
        out_shape=jax.ShapeDtypeStruct((B_pad, Lp), jnp.float32),
        grid=(B_pad // b_tile,),
        in_specs=[
            pl.BlockSpec((b_tile, S, H), lambda i: (i, 0, 0)),   # token embeddings
            pl.BlockSpec((b_tile, 1), lambda i: (i, 0)),         # lengths
            pl.BlockSpec((b_tile, 1), lambda i: (i, 0)),         # labels
            pl.BlockSpec((H, Lp), lambda i: (0, 0)),             # classifier weight
            pl.BlockSpec((1, Lp), lambda i: (0, 0)),             # classifier bias
        ],
        out_specs=pl.BlockSpec((b_tile, Lp), lambda i: (i, 0)),
        compiler_params=pltpu.CompilerParams(
            dimension_semantics=("parallel",),        # shard batch tiles across TCs
            vmem_limit_bytes=32 * 1024 * 1024),
    )(emb_bf, lens2d, labels2d, w_bf, b)

    out = out[:B]
    probs = out[:, :num_labels]
    preds = out[:, num_labels].astype(jnp.int32)[:, None]
    score_full = out[:, num_labels + 1:num_labels + 2]
    score_masked = out[:, num_labels + 2:num_labels + 3]
    decisions = out[:, num_labels + 3].astype(jnp.int32)[:, None]
    return probs, preds, score_full, score_masked, decisions


# --------------------------------------------------------------------------
# Pure-JAX reference (same math, f32) for a sanity check.
# --------------------------------------------------------------------------
def reference_forward(emb, lengths, labels, w, b, prefix_len, threshold, num_labels):
    B, S, H = emb.shape
    pos = jnp.arange(S)[None, :]

    def head(eff_len):
        mask = (pos < eff_len[:, None]).astype(jnp.float32)          # (B,S)
        denom = jnp.maximum(eff_len.astype(jnp.float32), 1.0)[:, None]
        pooled = jnp.einsum('bs,bsh->bh', mask, emb) / denom
        logits = pooled @ w + b
        return logits, jax.nn.softmax(logits, axis=1)

    logits_f, probs_f = head(lengths)
    _, probs_m = head(jnp.minimum(lengths, prefix_len))
    preds = jnp.argmax(logits_f, axis=1).astype(jnp.int32)[:, None]
    score_f = jnp.take_along_axis(probs_f, labels[:, None], axis=1)
    score_m = jnp.take_along_axis(probs_m, labels[:, None], axis=1)
    decisions = jnp.logical_and(preds == labels[:, None],
                                (score_f - score_m) < threshold).astype(jnp.int32)
    return probs_f[:, :num_labels], preds, score_f, score_m, decisions


if __name__ == "__main__":
    B, S, H = 16, 16, 128      # sentences, max_seq_length (toy), hidden size
    V = 64                     # toy vocab
    num_labels = 3             # e.g. ['negative', 'neutral', 'positive']
    L_pad = 128                # lane-dense padded label axis
    threshold = 0.1
    prefix_len = 4             # surrogate for masked_sen['text'][0:k]

    key = jax.random.PRNGKey(0)
    k_emb, k_w, k_b, k_ids, k_len, k_lab = jax.random.split(key, 6)

    # Deterministic synthetic "BERT" parameters.
    emb_table = 0.1 * jax.random.normal(k_emb, (V, H), jnp.float32)
    w = jnp.zeros((H, L_pad), jnp.float32).at[:, :num_labels].set(
        0.2 * jax.random.normal(k_w, (H, num_labels), jnp.float32))
    b = jnp.full((1, L_pad), -1e30, jnp.float32).at[:, :num_labels].set(
        0.1 * jax.random.normal(k_b, (1, num_labels), jnp.float32))

    # Example inputs (InputFeatures surrogate): token ids, lengths, labels.
    input_ids = jax.random.randint(k_ids, (B, S), 0, V)
    lengths = jax.random.randint(k_len, (B,), 1, S + 1).astype(jnp.int32)
    labels = jax.random.randint(k_lab, (B,), 0, num_labels).astype(jnp.int32)

    # Glue: embedding gather (layout [B, S, H]).
    emb = emb_table[input_ids]

    # One fused kernel: evaluate() on original + prefix-masked sentences and
    # the forward() mask-position decision.
    probs, preds, score_f, score_m, decisions = asc_forward(
        emb, lengths, labels, w, b, prefix_len=prefix_len, threshold=threshold,
        num_labels=num_labels, b_tile=8)
    jax.block_until_ready((probs, preds, score_f, score_m, decisions))

    # Sanity check vs pure-JAX reference on the same bf16-rounded operands
    # (kernel feeds bf16 to the MXU but accumulates in f32).
    emb_r = emb.astype(jnp.bfloat16).astype(jnp.float32)
    w_r = w.astype(jnp.bfloat16).astype(jnp.float32)
    ref_probs, ref_preds, ref_sf, ref_sm, ref_dec = reference_forward(
        emb_r, lengths, labels, w_r, b, prefix_len, threshold, num_labels)
    assert jnp.allclose(probs, ref_probs, atol=2e-3)
    assert jnp.allclose(score_f, ref_sf, atol=2e-3)
    assert jnp.allclose(score_m, ref_sm, atol=2e-3)

    # Exact self-consistency of the fused argmax / label-gather / decision logic.
    self_preds = jnp.argmax(probs, axis=1).astype(jnp.int32)[:, None]
    assert jnp.array_equal(preds, self_preds)
    self_dec = jnp.logical_and(preds == labels[:, None],
                               (score_f - score_m) < threshold).astype(jnp.int32)
    assert jnp.array_equal(decisions, self_dec)

    print("KERNEL_OK")
</pallas_src>

<mosaic_0001>
module attributes {stable_mosaic.version = 11 : i64} {
  func.func @asc_fused_kernel(%arg0: i32, %arg1: memref<8x16x128xbf16, #tpu.memory_space<vmem>>, %arg2: memref<8x1xi32, #tpu.memory_space<vmem>>, %arg3: memref<8x1xi32, #tpu.memory_space<vmem>>, %arg4: memref<128x128xbf16, #tpu.memory_space<vmem>>, %arg5: memref<1x128xf32, #tpu.memory_space<vmem>>, %arg6: memref<8x128xf32, #tpu.memory_space<vmem>>) attributes {dimension_semantics = [#tpu.dimension_semantics<parallel>], iteration_bounds = array<i64: 2>, scalar_prefetch = 0 : i64, scratch_operands = 0 : i64, tpu.core_type = #tpu.core_type<tc>, window_params = [{transform_indices = @transform_0, window_bounds = array<i64: 8, 16, 128>}, {transform_indices = @transform_1, window_bounds = array<i64: 8, 1>}, {transform_indices = @transform_2, window_bounds = array<i64: 8, 1>}, {pipeline_mode = #tpu.pipeline_mode<synchronous>, transform_indices = @transform_3, window_bounds = array<i64: 128, 128>}, {pipeline_mode = #tpu.pipeline_mode<synchronous>, transform_indices = @transform_4, window_bounds = array<i64: 1, 128>}, {transform_indices = @transform_5, window_bounds = array<i64: 8, 128>}]} {
    %c0 = arith.constant 0 : index
    %c0_0 = arith.constant 0 : index
    %c0_1 = arith.constant 0 : index
    %0 = vector.load %arg1[%c0, %c0_0, %c0_1] : memref<8x16x128xbf16, #tpu.memory_space<vmem>>, vector<8x16x128xbf16>
    %c0_2 = arith.constant 0 : index
    %c0_3 = arith.constant 0 : index
    %1 = vector.load %arg2[%c0_2, %c0_3] : memref<8x1xi32, #tpu.memory_space<vmem>>, vector<8x1xi32>
    %c0_4 = arith.constant 0 : index
    %c0_5 = arith.constant 0 : index
    %2 = vector.load %arg3[%c0_4, %c0_5] : memref<8x1xi32, #tpu.memory_space<vmem>>, vector<8x1xi32>
    %c0_6 = arith.constant 0 : index
    %c0_7 = arith.constant 0 : index
    %3 = vector.load %arg4[%c0_6, %c0_7] : memref<128x128xbf16, #tpu.memory_space<vmem>>, vector<128x128xbf16>
    %c0_8 = arith.constant 0 : index
    %c0_9 = arith.constant 0 : index
    %4 = vector.load %arg5[%c0_8, %c0_9] : memref<1x128xf32, #tpu.memory_space<vmem>>, vector<1x128xf32>
    %5 = tpu.iota {dimensions = array<i32: 1>} : vector<8x16xi32>
    %6 = arith.sitofp %1 : vector<8x1xi32> to vector<8x1xf32>
    %cst = arith.constant 1.000000e+00 : f32
    %7 = vector.broadcast %cst : f32 to vector<8x1xf32>
    %8 = arith.maximumf %6, %7 : vector<8x1xf32>
    %cst_10 = arith.constant 1.000000e+00 : f32
    %9 = vector.broadcast %cst_10 : f32 to vector<8x1xf32>
    %10 = arith.divf %9, %8 : vector<8x1xf32>
    %11 = vector.broadcast %1 : vector<8x1xi32> to vector<8x16xi32>
    %12 = arith.cmpi slt, %5, %11 : vector<8x16xi32>
    %cst_11 = arith.constant 0.000000e+00 : f32
    %13 = vector.shape_cast %10 : vector<8x1xf32> to vector<8x1xf32>
    %14 = vector.broadcast %13 : vector<8x1xf32> to vector<8x16xf32>
    %15 = vector.broadcast %cst_11 : f32 to vector<8x16xf32>
    %16 = arith.select %12, %14, %15 : vector<8x16xi1>, vector<8x16xf32>
    %17 = vector.shape_cast %16 : vector<8x16xf32> to vector<8x16x1xf32>
    %18 = arith.extf %0 : vector<8x16x128xbf16> to vector<8x16x128xf32>
    %19 = vector.broadcast %17 : vector<8x16x1xf32> to vector<8x16x128xf32>
    %20 = arith.mulf %18, %19 : vector<8x16x128xf32>
    %cst_12 = arith.constant dense<0.000000e+00> : vector<8x128xf32>
    %21 = vector.multi_reduction <add>, %20, %cst_12 [1] : vector<8x16x128xf32> to vector<8x128xf32>
    %c4_i32 = arith.constant 4 : i32
    %22 = vector.broadcast %c4_i32 : i32 to vector<8x1xi32>
    %23 = arith.minsi %1, %22 : vector<8x1xi32>
    %24 = arith.sitofp %23 : vector<8x1xi32> to vector<8x1xf32>
    %cst_13 = arith.constant 1.000000e+00 : f32
    %25 = vector.broadcast %cst_13 : f32 to vector<8x1xf32>
    %26 = arith.maximumf %24, %25 : vector<8x1xf32>
    %cst_14 = arith.constant 1.000000e+00 : f32
    %27 = vector.broadcast %cst_14 : f32 to vector<8x1xf32>
    %28 = arith.divf %27, %26 : vector<8x1xf32>
    %29 = vector.broadcast %23 : vector<8x1xi32> to vector<8x16xi32>
    %30 = arith.cmpi slt, %5, %29 : vector<8x16xi32>
    %cst_15 = arith.constant 0.000000e+00 : f32
    %31 = vector.shape_cast %28 : vector<8x1xf32> to vector<8x1xf32>
    %32 = vector.broadcast %31 : vector<8x1xf32> to vector<8x16xf32>
    %33 = vector.broadcast %cst_15 : f32 to vector<8x16xf32>
    %34 = arith.select %30, %32, %33 : vector<8x16xi1>, vector<8x16xf32>
    %35 = vector.shape_cast %34 : vector<8x16xf32> to vector<8x16x1xf32>
    %36 = arith.extf %0 : vector<8x16x128xbf16> to vector<8x16x128xf32>
    %37 = vector.broadcast %35 : vector<8x16x1xf32> to vector<8x16x128xf32>
    %38 = arith.mulf %36, %37 : vector<8x16x128xf32>
    %cst_16 = arith.constant dense<0.000000e+00> : vector<8x128xf32>
    %39 = vector.multi_reduction <add>, %38, %cst_16 [1] : vector<8x16x128xf32> to vector<8x128xf32>
    %40 = tpu.concatenate %21, %39 in 0 : vector<8x128xf32>, vector<8x128xf32> -> vector<16x128xf32>
    %41 = arith.truncf %40 : vector<16x128xf32> to vector<16x128xbf16>
    %cst_17 = arith.constant dense<0.000000e+00> : vector<16x128xf32>
    %42 = tpu.matmul %41, %3, %cst_17 {dimension_numbers = #tpu.dot_dimension_numbers<[1], [0], [0], [1], [0, 0, 1, 1], [], []>} : vector<16x128xbf16>, vector<128x128xbf16>, vector<16x128xf32> -> vector<16x128xf32>
    %43 = vector.broadcast %4 : vector<1x128xf32> to vector<16x128xf32>
    %44 = arith.addf %42, %43 : vector<16x128xf32>
    %cst_18 = arith.constant dense<0xFF800000> : vector<16xf32>
    %45 = vector.multi_reduction <maximumf>, %44, %cst_18 [1] : vector<16x128xf32> to vector<16xf32>
    %46 = vector.shape_cast %45 : vector<16xf32> to vector<16x1xf32>
    %47 = vector.broadcast %46 : vector<16x1xf32> to vector<16x128xf32>
    %48 = arith.subf %44, %47 : vector<16x128xf32>
    %49 = math.exp %48 : vector<16x128xf32>
    %cst_19 = arith.constant dense<0.000000e+00> : vector<16xf32>
    %50 = vector.multi_reduction <add>, %49, %cst_19 [1] : vector<16x128xf32> to vector<16xf32>
    %51 = vector.shape_cast %50 : vector<16xf32> to vector<16x1xf32>
    %52 = vector.extract_strided_slice %44 {offsets = [0, 0], sizes = [8, 128], strides = [1, 1]} : vector<16x128xf32> to vector<8x128xf32>
    %53 = vector.extract_strided_slice %46 {offsets = [0, 0], sizes = [8, 1], strides = [1, 1]} : vector<16x1xf32> to vector<8x1xf32>
    %54 = vector.extract_strided_slice %49 {offsets = [0, 0], sizes = [8, 128], strides = [1, 1]} : vector<16x128xf32> to vector<8x128xf32>
    %55 = vector.extract_strided_slice %51 {offsets = [0, 0], sizes = [8, 1], strides = [1, 1]} : vector<16x1xf32> to vector<8x1xf32>
    %56 = vector.extract_strided_slice %49 {offsets = [8, 0], sizes = [8, 128], strides = [1, 1]} : vector<16x128xf32> to vector<8x128xf32>
    %57 = vector.extract_strided_slice %51 {offsets = [8, 0], sizes = [8, 1], strides = [1, 1]} : vector<16x1xf32> to vector<8x1xf32>
    %58 = tpu.reciprocal %55 : vector<8x1xf32> -> vector<8x1xf32>
    %59 = vector.broadcast %58 : vector<8x1xf32> to vector<8x128xf32>
    %60 = arith.mulf %54, %59 : vector<8x128xf32>
    %61 = tpu.iota {dimensions = array<i32: 1>} : vector<8x128xi32>
    %62 = vector.broadcast %53 : vector<8x1xf32> to vector<8x128xf32>
    %63 = arith.cmpf oge, %52, %62 : vector<8x128xf32>
    %c128_i32 = arith.constant 128 : i32
    %64 = vector.broadcast %c128_i32 : i32 to vector<8x128xi32>
    %65 = arith.select %63, %61, %64 : vector<8x128xi1>, vector<8x128xi32>
    %cst_20 = arith.constant dense<2147483647> : vector<8xi32>
    %66 = vector.multi_reduction <minsi>, %65, %cst_20 [1] : vector<8x128xi32> to vector<8xi32>
    %67 = vector.shape_cast %66 : vector<8xi32> to vector<8x1xi32>
    %68 = vector.broadcast %2 : vector<8x1xi32> to vector<8x128xi32>
    %69 = arith.cmpi eq, %61, %68 : vector<8x128xi32>
    %cst_21 = arith.constant 0.000000e+00 : f32
    %70 = vector.broadcast %cst_21 : f32 to vector<8x128xf32>
    %71 = arith.select %69, %60, %70 : vector<8x128xi1>, vector<8x128xf32>
    %cst_22 = arith.constant dense<0.000000e+00> : vector<8xf32>
    %72 = vector.multi_reduction <add>, %71, %cst_22 [1] : vector<8x128xf32> to vector<8xf32>
    %73 = vector.shape_cast %72 : vector<8xf32> to vector<8x1xf32>
    %cst_23 = arith.constant 0.000000e+00 : f32
    %74 = vector.broadcast %cst_23 : f32 to vector<8x128xf32>
    %75 = arith.select %69, %56, %74 : vector<8x128xi1>, vector<8x128xf32>
    %cst_24 = arith.constant dense<0.000000e+00> : vector<8xf32>
    %76 = vector.multi_reduction <add>, %75, %cst_24 [1] : vector<8x128xf32> to vector<8xf32>
    %77 = vector.shape_cast %76 : vector<8xf32> to vector<8x1xf32>
    %78 = tpu.reciprocal %57 : vector<8x1xf32> -> vector<8x1xf32>
    %79 = arith.mulf %77, %78 : vector<8x1xf32>
    %80 = arith.cmpi eq, %67, %2 : vector<8x1xi32>
    %81 = arith.subf %73, %79 : vector<8x1xf32>
    %cst_25 = arith.constant 1.000000e-01 : f32
    %82 = vector.broadcast %cst_25 : f32 to vector<8x1xf32>
    %83 = arith.cmpf olt, %81, %82 : vector<8x1xf32>
    %84 = arith.andi %80, %83 : vector<8x1xi1>
    %85 = arith.extui %84 : vector<8x1xi1> to vector<8x1xi32>
    %86 = arith.sitofp %85 : vector<8x1xi32> to vector<8x1xf32>
    %c3_i32 = arith.constant 3 : i32
    %87 = vector.broadcast %c3_i32 : i32 to vector<8x128xi32>
    %88 = arith.cmpi slt, %61, %87 : vector<8x128xi32>
    %cst_26 = arith.constant 0.000000e+00 : f32
    %89 = vector.broadcast %cst_26 : f32 to vector<8x128xf32>
    %90 = arith.select %88, %60, %89 : vector<8x128xi1>, vector<8x128xf32>
    %c3_i32_27 = arith.constant 3 : i32
    %91 = vector.broadcast %c3_i32_27 : i32 to vector<8x128xi32>
    %92 = arith.cmpi eq, %61, %91 : vector<8x128xi32>
    %93 = arith.sitofp %67 : vector<8x1xi32> to vector<8x1xf32>
    %cst_28 = arith.constant 0.000000e+00 : f32
    %94 = vector.shape_cast %93 : vector<8x1xf32> to vector<8x1xf32>
    %95 = vector.broadcast %94 : vector<8x1xf32> to vector<8x128xf32>
    %96 = vector.broadcast %cst_28 : f32 to vector<8x128xf32>
    %97 = arith.select %92, %95, %96 : vector<8x128xi1>, vector<8x128xf32>
    %98 = arith.addf %90, %97 : vector<8x128xf32>
    %c4_i32_29 = arith.constant 4 : i32
    %99 = vector.broadcast %c4_i32_29 : i32 to vector<8x128xi32>
    %100 = arith.cmpi eq, %61, %99 : vector<8x128xi32>
    %cst_30 = arith.constant 0.000000e+00 : f32
    %101 = vector.shape_cast %73 : vector<8x1xf32> to vector<8x1xf32>
    %102 = vector.broadcast %101 : vector<8x1xf32> to vector<8x128xf32>
    %103 = vector.broadcast %cst_30 : f32 to vector<8x128xf32>
    %104 = arith.select %100, %102, %103 : vector<8x128xi1>, vector<8x128xf32>
    %105 = arith.addf %98, %104 : vector<8x128xf32>
    %c5_i32 = arith.constant 5 : i32
    %106 = vector.broadcast %c5_i32 : i32 to vector<8x128xi32>
    %107 = arith.cmpi eq, %61, %106 : vector<8x128xi32>
    %cst_31 = arith.constant 0.000000e+00 : f32
    %108 = vector.shape_cast %79 : vector<8x1xf32> to vector<8x1xf32>
    %109 = vector.broadcast %108 : vector<8x1xf32> to vector<8x128xf32>
    %110 = vector.broadcast %cst_31 : f32 to vector<8x128xf32>
    %111 = arith.select %107, %109, %110 : vector<8x128xi1>, vector<8x128xf32>
    %112 = arith.addf %105, %111 : vector<8x128xf32>
    %c6_i32 = arith.constant 6 : i32
    %113 = vector.broadcast %c6_i32 : i32 to vector<8x128xi32>
    %114 = arith.cmpi eq, %61, %113 : vector<8x128xi32>
    %cst_32 = arith.constant 0.000000e+00 : f32
    %115 = vector.shape_cast %86 : vector<8x1xf32> to vector<8x1xf32>
    %116 = vector.broadcast %115 : vector<8x1xf32> to vector<8x128xf32>
    %117 = vector.broadcast %cst_32 : f32 to vector<8x128xf32>
    %118 = arith.select %114, %116, %117 : vector<8x128xi1>, vector<8x128xf32>
    %119 = arith.addf %112, %118 : vector<8x128xf32>
    %c0_33 = arith.constant 0 : index
    %c0_34 = arith.constant 0 : index
    %120 = vector.load %arg6[%c0_33, %c0_34] : memref<8x128xf32, #tpu.memory_space<vmem>>, vector<8x128xf32>
    tpu.vector_store %arg6[%c0_33, %c0_34], %119 {strides = array<i32>} : memref<8x128xf32, #tpu.memory_space<vmem>>, vector<8x128xf32>,
    return
  }
  func.func @transform_0(%arg0: i32) -> (i32, i32, i32) {
    %c0_i32 = arith.constant 0 : i32
    %c0_i32_0 = arith.constant 0 : i32
    %c0_i32_1 = arith.constant 0 : i32
    return %arg0, %c0_i32, %c0_i32_0 : i32, i32, i32
  }
  func.func @transform_1(%arg0: i32) -> (i32, i32) {
    %c0_i32 = arith.constant 0 : i32
    %c0_i32_0 = arith.constant 0 : i32
    return %arg0, %c0_i32 : i32, i32
  }
  func.func @transform_2(%arg0: i32) -> (i32, i32) {
    %c0_i32 = arith.constant 0 : i32
    %c0_i32_0 = arith.constant 0 : i32
    return %arg0, %c0_i32 : i32, i32
  }
  func.func @transform_3(%arg0: i32) -> (i32, i32) {
    %c0_i32 = arith.constant 0 : i32
    %c0_i32_0 = arith.constant 0 : i32
    %c0_i32_1 = arith.constant 0 : i32
    return %c0_i32, %c0_i32_0 : i32, i32
  }
  func.func @transform_4(%arg0: i32) -> (i32, i32) {
    %c0_i32 = arith.constant 0 : i32
    %c0_i32_0 = arith.constant 0 : i32
    %c0_i32_1 = arith.constant 0 : i32
    return %c0_i32, %c0_i32_0 : i32, i32
  }
  func.func @transform_5(%arg0: i32) -> (i32, i32) {
    %c0_i32 = arith.constant 0 : i32
    %c0_i32_0 = arith.constant 0 : i32
    return %arg0, %c0_i32 : i32, i32
  }
}

</mosaic_0001>

<llo_original>
// kernel: tpu_custom_call.1
$region0: #{tpu_custom_call.1}
  #allocation0 [shape = 'u32[]', space=smem, size = 0x4, offset = 0x4, fixed_abs, tag = 'smem constant byte address 0x4 - core index']
  #allocation1 [shape = 'u32[144,128]{1,0:T(1,128)}', space=vmem, size = 0x12000, scoped, tag = 'internal scratch']
  %s0 = inlined_call_operand.hbm [shape: bf16[16,16,128], index: 0, kind: input, shape index: {}]
  %s1 = inlined_call_operand.vmem [shape: s32[16,1], index: 1, kind: input, shape index: {}]
  %s2 = inlined_call_operand.vmem [shape: s32[16,1], index: 2, kind: input, shape index: {}]
  %s3 = inlined_call_operand.hbm [shape: bf16[128,128], index: 3, kind: input, shape index: {}]
  %s4 = inlined_call_operand.vmem [shape: f32[1,128], index: 4, kind: input, shape index: {}]
  %s5 = inlined_call_operand.hbm [shape: f32[16,128], index: 5, kind: output, shape index: {}]
  %s6 = sld [smem:[#allocation0]]
  $region61: #{tpu_custom_call.1} parent=0
    _
  %s8 = ssub.s32 1, %s6
  %s9 = scalar_select 0, %s8, %s6
  $region1: #{tpu_custom_call.1} parent=0
    #allocation2 [shape = 'u8[65536]{0}', space=vmem, size = 0x10000, scoped, tag = 'input window, operand 0']
    #allocation3 [shape = 's32[2]{0}', space=sflag, size = 0x8, scoped, tag = 'scoped memory for tpu_custom_call.1']
    #allocation4 [shape = 's32[2]{0}', space=sflag, size = 0x8, scoped, tag = 'scoped memory for tpu_custom_call.1']
    #allocation5 [shape = 'u8[32768]{0}', space=vmem, size = 0x8000, scoped, tag = 'input window, operand 3, single buffered']
    #allocation6 [shape = 's32[1]{0}', space=sflag, size = 0x4, scoped, tag = 'scoped memory for tpu_custom_call.1']
    #allocation7 [shape = 'u8[8192]{0}', space=vmem, size = 0x2000, scoped, tag = 'output window, operand 0']
    %10 = vsyncpa [#allocation3], 0
    %s11 = scalar_lea.sflag [#allocation3], 1
    %12 = vsyncpa %s11, 0
    %13 = vsyncpa [#allocation6], 0
    %14 = vsyncpa [#allocation4], 0
    %s15 = scalar_lea.sflag [#allocation4], 1
    %16 = vsyncpa %s15, 0
    loop: start=0, step=1, limit=4
    $region2: #{tpu_custom_call.1} parent=1 // loop_pre_header
      _
    $region3: #{tpu_custom_call.1} parent=1 // loop_header
      %s18 = sphi 0, %s22
      %p19 = scmp.ge.s32.totalorder %s18, 4
      %s28 = sphi 0, %s30
      %s31 = sphi 0, %s28
      %s32 = sphi 0, %s31
      %s48 = sphi 0, %s32
      %s54 = sphi 0, %s56
      %s57 = sphi 0, %s54
      %s58 = sphi 0, %s57
      %s74 = sphi 0, %s58
      %s80 = sphi 0, %s82
      %s83 = sphi 0, %s80
      %s84 = sphi 0, %s83
      %s100 = sphi 0, %s84
      %s104 = sphi 0, %s104
      %s106 = sphi 0, %s104
      %s107 = sphi 0, %s106
      %s121 = sphi 0, %s107
      %s125 = sphi 0, %s125
      %s127 = sphi 0, %s125
      %s128 = sphi 0, %s127
      %s142 = sphi 0, %s128
      %s148 = sphi 0, %s150
      %s151 = sphi 0, %s148
      %s152 = sphi 0, %s151
      %s168 = sphi 0, %s152
    $region4: #{tpu_custom_call.1} parent=1 // loop_header_branch
      %21 = sbr.rel (%p19) target = $region8
    $region5: #{tpu_custom_call.1} parent=1 // loop_body
      %s23 = ssub.s32 %s18, 1
      %s24 = ssub.s32 %s18, 2
      %s25 = sadd.s32 %s18, 1
      %s26 = ssub.s32 %s18, %s25
      %p27 = scmp.eq.s32.totalorder %s26, 0
      %s29 = sadd.s32 %s28, 1
      %s30 = scalar_select %p27, %s28, %s29
      %p33 = pneg %p27
      %p34 = scmp.eq.s32.totalorder %s18, 1
      %p35 = por %p33, %p34
      %p36 = scmp.ne.s32.totalorder %s28, %s31
      %p37 = scmp.eq.s32.totalorder %s18, 0
      %p38 = por %p36, %p37
      %p39 = scmp.ne.s32.totalorder %s28, %s31
      %p40 = scmp.eq.s32.totalorder %s23, 1
      %p41 = por %p39, %p40
      %p42 = scmp.ne.s32.totalorder %s31, %s32
      %p43 = scmp.eq.s32.totalorder %s23, 0
      %p44 = por %p42, %p43
      %p45 = scmp.ne.s32.totalorder %s31, %s32
      %p46 = scmp.eq.s32.totalorder %s24, 1
      %p47 = por %p45, %p46
      %p49 = scmp.ne.s32.totalorder %s32, %s48
      %p50 = scmp.eq.s32.totalorder %s24, 0
      %p51 = por %p49, %p50
      %s52 = ssub.s32 %s18, %s25
      %p53 = scmp.eq.s32.totalorder %s52, 0
      %s55 = sadd.s32 %s54, 1
      %s56 = scalar_select %p53, %s54, %s55
      %p59 = pneg %p53
      %p60 = scmp.eq.s32.totalorder %s18, 1
      %p61 = por %p59, %p60
      %p62 = scmp.ne.s32.totalorder %s54, %s57
      %p63 = scmp.eq.s32.totalorder %s18, 0
      %p64 = por %p62, %p63
      %p65 = scmp.ne.s32.totalorder %s54, %s57
      %p66 = scmp.eq.s32.totalorder %s23, 1
      %p67 = por %p65, %p66
      %p68 = scmp.ne.s32.totalorder %s57, %s58
      %p69 = scmp.eq.s32.totalorder %s23, 0
      %p70 = por %p68, %p69
      %p71 = scmp.ne.s32.totalorder %s57, %s58
      %p72 = scmp.eq.s32.totalorder %s24, 1
      %p73 = por %p71, %p72
      %p75 = scmp.ne.s32.totalorder %s58, %s74
      %p76 = scmp.eq.s32.totalorder %s24, 0
      %p77 = por %p75, %p76
      %s78 = ssub.s32 %s18, %s25
      %p79 = scmp.eq.s32.totalorder %s78, 0
      %s81 = sadd.s32 %s80, 1
      %s82 = scalar_select %p79, %s80, %s81
      %p85 = pneg %p79
      %p86 = scmp.eq.s32.totalorder %s18, 1
      %p87 = por %p85, %p86
      %p88 = scmp.ne.s32.totalorder %s80, %s83
      %p89 = scmp.eq.s32.totalorder %s18, 0
      %p90 = por %p88, %p89
      %p91 = scmp.ne.s32.totalorder %s80, %s83
      %p92 = scmp.eq.s32.totalorder %s23, 1
      %p93 = por %p91, %p92
      %p94 = scmp.ne.s32.totalorder %s83, %s84
      %p95 = scmp.eq.s32.totalorder %s23, 0
      %p96 = por %p94, %p95
      %p97 = scmp.ne.s32.totalorder %s83, %s84
      %p98 = scmp.eq.s32.totalorder %s24, 1
      %p99 = por %p97, %p98
      %p101 = scmp.ne.s32.totalorder %s84, %s100
      %p102 = scmp.eq.s32.totalorder %s24, 0
      %p103 = por %p101, %p102
      %s105 = sadd.s32 %s104, 1
      %p108 = scmp.eq.s32.totalorder %s18, 1
      %p109 = scmp.ne.s32.totalorder %s104, %s106
      %p110 = scmp.eq.s32.totalorder %s18, 0
      %p111 = por %p109, %p110
      %p112 = scmp.ne.s32.totalorder %s104, %s106
      %p113 = scmp.eq.s32.totalorder %s23, 1
      %p114 = por %p112, %p113
      %p115 = scmp.ne.s32.totalorder %s106, %s107
      %p116 = scmp.eq.s32.totalorder %s23, 0
      %p117 = por %p115, %p116
      %p118 = scmp.ne.s32.totalorder %s106, %s107
      %p119 = scmp.eq.s32.totalorder %s24, 1
      %p120 = por %p118, %p119
      %p122 = scmp.ne.s32.totalorder %s107, %s121
      %p123 = scmp.eq.s32.totalorder %s24, 0
      %p124 = por %p122, %p123
      %s126 = sadd.s32 %s125, 1
      %p129 = scmp.eq.s32.totalorder %s18, 1
      %p130 = scmp.ne.s32.totalorder %s125, %s127
      %p131 = scmp.eq.s32.totalorder %s18, 0
      %p132 = por %p130, %p131
      %p133 = scmp.ne.s32.totalorder %s125, %s127
      %p134 = scmp.eq.s32.totalorder %s23, 1
      %p135 = por %p133, %p134
      %p136 = scmp.ne.s32.totalorder %s127, %s128
      %p137 = scmp.eq.s32.totalorder %s23, 0
      %p138 = por %p136, %p137
      %p139 = scmp.ne.s32.totalorder %s127, %s128
      %p140 = scmp.eq.s32.totalorder %s24, 1
      %p141 = por %p139, %p140
      %p143 = scmp.ne.s32.totalorder %s128, %s142
      %p144 = scmp.eq.s32.totalorder %s24, 0
      %p145 = por %p143, %p144
      %s146 = ssub.s32 %s18, %s25
      %p147 = scmp.eq.s32.totalorder %s146, 0
      %s149 = sadd.s32 %s148, 1
      %s150 = scalar_select %p147, %s148, %s149
      %p153 = pneg %p147
      %p154 = scmp.eq.s32.totalorder %s18, 1
      %p155 = por %p153, %p154
      %p156 = scmp.ne.s32.totalorder %s148, %s151
      %p157 = scmp.eq.s32.totalorder %s18, 0
      %p158 = por %p156, %p157
      %p159 = scmp.ne.s32.totalorder %s148, %s151
      %p160 = scmp.eq.s32.totalorder %s23, 1
      %p161 = por %p159, %p160
      %p162 = scmp.ne.s32.totalorder %s151, %s152
      %p163 = scmp.eq.s32.totalorder %s23, 0
      %p164 = por %p162, %p163
      %p165 = scmp.ne.s32.totalorder %s151, %s152
      %p166 = scmp.eq.s32.totalorder %s24, 1
      %p167 = por %p165, %p166
      %p169 = scmp.ne.s32.totalorder %s152, %s168
      %p170 = scmp.eq.s32.totalorder %s24, 0
      %p171 = por %p169, %p170
      %p172 = scmp.le.s32.totalorder 1, %s18
      %p173 = scmp.lt.s32.totalorder %s18, 3
      %p174 = pnand %p172, %p173
      %p175 = pneg %p174
      // Predicated region
      $region9: #{tpu_custom_call.1} parent=5 // pred_check
        _
      $region10: #{tpu_custom_call.1} parent=5 // pred_check_branch
        %177 = sbr.rel (%p174) target = $region12
      $region11: #{tpu_custom_call.1} parent=5 // pred_region
        %s178 = ssub.s32 %s18, 1
        // Predicated region
        $region13: #{tpu_custom_call.1} parent=11 // pred_check
          %p179 = pneg %p117
        $region14: #{tpu_custom_call.1} parent=11 // pred_check_branch
          %181 = sbr.rel (%p179) target = $region16
        $region15: #{tpu_custom_call.1} parent=11 // pred_region
          %s183 = ssub.s32 1024, 1024
          %184 = vsyncadd [#allocation6], %s183
          %s185 = sshll.u32 [#allocation5], 4
          %s186 = int_to_ptr.vmem [resolvable:$true] %s185
          %191 = dma.hbm_to_vmem [thread:$0]  %s3, 1024, %s186, [#allocation6], 64, 64, 4
        $region16: #{tpu_custom_call.1} parent=11 // pred_fallthru
          _
        // Predicated region
        $region17: #{tpu_custom_call.1} parent=11 // pred_check
          %p192 = pneg %p138
        $region18: #{tpu_custom_call.1} parent=11 // pred_check_branch
          %194 = sbr.rel (%p192) target = $region20
        $region19: #{tpu_custom_call.1} parent=11 // pred_region
          _
        $region20: #{tpu_custom_call.1} parent=11 // pred_fallthru
          _
      $region12: #{tpu_custom_call.1} parent=5 // pred_fallthru
        _
      %p195 = scmp.lt.s32.totalorder %s18, 2
      // Predicated region
      $region21: #{tpu_custom_call.1} parent=5 // pred_check
        %p196 = pneg %p195
      $region22: #{tpu_custom_call.1} parent=5 // pred_check_branch
        %198 = sbr.rel (%p196) target = $region24
      $region23: #{tpu_custom_call.1} parent=5 // pred_region
        // Predicated region
        $region25: #{tpu_custom_call.1} parent=23 // pred_check
          %p199 = pneg %p38
        $region26: #{tpu_custom_call.1} parent=23 // pred_check_branch
          %201 = sbr.rel (%p199) target = $region28
        $region27: #{tpu_custom_call.1} parent=23 // pred_region
          %s202 = sand.u32 %s28, 1
          %s203 = scalar_lea.sflag [#allocation3], %s202
          %s204 = sand.u32 %s28, 1
          %s205 = smul.addr %s204, 64
          %s206 = scalar_lea.vmem [#allocation2], %s205
          %s207 = smul.u32 8, %s18
          %s209 = ssub.s32 1024, 1024
          %210 = vsyncadd %s203, %s209
          %s211 = smul.addr %s207, 2
          %s212 = smul.addr %s211, 64
          %s213 = scalar_lea.hbm %s0, %s212
          %s214 = sshll.u32 %s206, 4
          %s215 = int_to_ptr.vmem [resolvable:$true] %s214
          %220 = dma.hbm_to_vmem [thread:$0]  %s213, 1024, %s215, %s203, 64, 64, 4
        $region28: #{tpu_custom_call.1} parent=23 // pred_fallthru
          _
        // Predicated region
        $region29: #{tpu_custom_call.1} parent=23 // pred_check
          %p221 = pneg %p64
        $region30: #{tpu_custom_call.1} parent=23 // pred_check_branch
          %223 = sbr.rel (%p221) target = $region32
        $region31: #{tpu_custom_call.1} parent=23 // pred_region
          %p224 = scmp.lt.s32.totalorder %s18, 1
          %s225 = scalar_select %p224, %s18, 1
          %s226 = smul.addr %s225, 8
          %s227 = scalar_lea.vmem %s1, %s226
        $region32: #{tpu_custom_call.1} parent=23 // pred_fallthru
          _
        // Predicated region
        $region33: #{tpu_custom_call.1} parent=23 // pred_check
          %p228 = pneg %p90
        $region34: #{tpu_custom_call.1} parent=23 // pred_check_branch
          %230 = sbr.rel (%p228) target = $region36
        $region35: #{tpu_custom_call.1} parent=23 // pred_region
          %p231 = scmp.lt.s32.totalorder %s18, 1
          %s232 = scalar_select %p231, %s18, 1
          %s233 = smul.addr %s232, 8
          %s234 = scalar_lea.vmem %s2, %s233
        $region36: #{tpu_custom_call.1} parent=23 // pred_fallthru
          _
      $region24: #{tpu_custom_call.1} parent=5 // pred_fallthru
        _
      %p235 = scmp.le.s32.totalorder 1, %s18
      %p236 = scmp.lt.s32.totalorder %s18, 3
      %p237 = pnand %p235, %p236
      %p238 = pneg %p237
      // Predicated region
      $region37: #{tpu_custom_call.1} parent=5 // pred_check
        _
      $region38: #{tpu_custom_call.1} parent=5 // pred_check_branch
        %240 = sbr.rel (%p237) target = $region40
      $region39: #{tpu_custom_call.1} parent=5 // pred_region
        %s241 = ssub.s32 %s18, 1
        %s242 = sand.u32 %s31, 1
        %s243 = scalar_lea.sflag [#allocation3], %s242
        %s244 = sand.u32 %s31, 1
        %s245 = smul.addr %s244, 64
        %s246 = scalar_lea.vmem [#allocation2], %s245
        // Predicated region
        $region41: #{tpu_custom_call.1} parent=39 // pred_check
          %p247 = pneg %p44
        $region42: #{tpu_custom_call.1} parent=39 // pred_check_branch
          %249 = sbr.rel (%p247) target = $region44
        $region43: #{tpu_custom_call.1} parent=39 // pred_region
          %250 = dma.done %s243, 1024
        $region44: #{tpu_custom_call.1} parent=39 // pred_fallthru
          _
        // Predicated region
        $region45: #{tpu_custom_call.1} parent=39 // pred_check
          %p251 = pneg %p117
        $region46: #{tpu_custom_call.1} parent=39 // pred_check_branch
          %253 = sbr.rel (%p251) target = $region48
        $region47: #{tpu_custom_call.1} parent=39 // pred_region
          %254 = dma.done [#allocation6], 1024
        $region48: #{tpu_custom_call.1} parent=39 // pred_fallthru
          _
        %s255 = sand.u32 %s31, 1
        %s256 = scalar_lea.sflag [#allocation3], %s255
        %s257 = sand.u32 %s31, 1
        %s258 = smul.addr %s257, 64
        %s259 = scalar_lea.vmem [#allocation2], %s258
        %p260 = pneg %p44
        %p261 = pneg %p41
        %p262 = scmp.lt.s32.totalorder %s23, 1
        %s263 = scalar_select %p262, %s23, 1
        %s264 = smul.addr %s263, 8
        %s265 = scalar_lea.vmem %s1, %s264
        %p266 = pneg %p70
        %p267 = pneg %p67
        %p268 = scmp.lt.s32.totalorder %s23, 1
        %s269 = scalar_select %p268, %s23, 1
        %s270 = smul.addr %s269, 8
        %s271 = scalar_lea.vmem %s2, %s270
        %p272 = pneg %p96
        %p273 = pneg %p93
        %p274 = pneg %p117
        %p275 = pneg %p114
        %p276 = pneg %p138
        %p277 = pneg %p135
        %p278 = pneg %p164
        %p279 = pneg %p161
        %s280 = sand.u32 %s151, 1
        %s281 = scalar_lea.sflag [#allocation4], %s280
        %s282 = sand.u32 %s151, 1
        %s283 = smul.addr %s282, 8
        %s284 = scalar_lea.vmem [#allocation7], %s283
        %s285 = smul.u32 8, %s23
        %p286 = scmp.lt.s32.totalorder %s23, 1
        %s287 = scalar_select %p286, %s23, 1
        %s288 = smul.addr %s287, 8
        %s289 = scalar_lea.vmem %s1, %s288
        %p290 = scmp.lt.s32.totalorder %s23, 1
        %s291 = scalar_select %p290, %s23, 1
        %s292 = smul.addr %s291, 8
        %s293 = scalar_lea.vmem %s2, %s292
        %v295 = vld [vmem:[%s246] sm:$0xf]
        %v296 = vld [vmem:[%s246 + $0x4] sm:$0xf]
        %v297 = vld [vmem:[%s246 + $0x8] sm:$0xf]
        %v298 = vld [vmem:[%s246 + $0xc] sm:$0xf]
        %v299 = vld [vmem:[%s246 + $0x10] sm:$0xf]
        %v300 = vld [vmem:[%s246 + $0x14] sm:$0xf]
        %v301 = vld [vmem:[%s246 + $0x18] sm:$0xf]
        %v302 = vld [vmem:[%s246 + $0x1c] sm:$0xf]
        %v303 = vld [vmem:[%s246 + $0x20] sm:$0xf]
        %v304 = vld [vmem:[%s246 + $0x24] sm:$0xf]
        %v305 = vld [vmem:[%s246 + $0x28] sm:$0xf]
        %v306 = vld [vmem:[%s246 + $0x2c] sm:$0xf]
        %v307 = vld [vmem:[%s246 + $0x30] sm:$0xf]
        %v308 = vld [vmem:[%s246 + $0x34] sm:$0xf]
        %v309 = vld [vmem:[%s246 + $0x38] sm:$0xf]
        %v310 = vld [vmem:[%s246 + $0x3c] sm:$0xf]
        %v311 = vld [vmem:[%s289] sm:$0xff]
        %v312 = vld [vmem:[%s293] sm:$0xff]
        %v313 = vld [vmem:[#allocation5] sm:$0xf]
        %v314 = vld [vmem:[#allocation5 + $0x4] sm:$0xf]
        %v315 = vld [vmem:[#allocation5 + $0x8] sm:$0xf]
        %v316 = vld [vmem:[#allocation5 + $0xc] sm:$0xf]
        %v317 = vld [vmem:[#allocation5 + $0x10] sm:$0xf]
        %v318 = vld [vmem:[#allocation5 + $0x14] sm:$0xf]
        %v319 = vld [vmem:[#allocation5 + $0x18] sm:$0xf]
        %v320 = vld [vmem:[#allocation5 + $0x1c] sm:$0xf]
        %v321 = vld [vmem:[#allocation5 + $0x20] sm:$0xf]
        %v322 = vld [vmem:[#allocation5 + $0x24] sm:$0xf]
        %v323 = vld [vmem:[#allocation5 + $0x28] sm:$0xf]
        %v324 = vld [vmem:[#allocation5 + $0x2c] sm:$0xf]
        %v325 = vld [vmem:[#allocation5 + $0x30] sm:$0xf]
        %v326 = vld [vmem:[#allocation5 + $0x34] sm:$0xf]
        %v327 = vld [vmem:[#allocation5 + $0x38] sm:$0xf]
        %v328 = vld [vmem:[#allocation5 + $0x3c] sm:$0xf]
        %v329 = vld [vmem:[%s4] sm:$0x1]
        %v330 = vlaneseq
        %v331 = vand.u32 %v330, 127
        %v332 = vcvt.s32.f32 %v311
        %v333 = vmax.f32 %v332, 1.0
        %v334 = vrcp.pop %v333
        %v335 = vmul.f32 1.0, %v334
        %336 = vset.pattern.permute.xlu0 0
        %337 = vperm.xlu0 %336, %v311
        %v338 = vpop.permute.xlu0 %337
        %vm339 = vcmp.lt.s32.totalorder %v331, %v338
        %341 = vset.pattern.permute.xlu0 0
        %342 = vperm.xlu0 %341, %v335
        %v343 = vpop.permute.xlu0 %342
        %v345 = vsel %vm339, %v343, 0.0
        %v346 = vlaneseq
        %v347 = vshrl.u32 %v346, 7
        %v348 = vsub.s32 0, %v347
        %v349 = vrot.slane %v345, %v348
        %351 = vbcast.lane.b32.xlu0 %v349, 256
        %v352 = vpop.permute.xlu0 %351
        %s354 = sor.u32 256, 8
        %355 = vbcast.lane.b32.xlu0 %v349, %s354
        %v356 = vpop.permute.xlu0 %355
        %v357 = vlaneseq
        %v358 = vshrl.u32 %v357, 7
        %v359 = vsub.s32 1, %v358
        %v360 = vrot.slane %v345, %v359
        %362 = vbcast.lane.b32.xlu0 %v360, 256
        %v363 = vpop.permute.xlu0 %362
        %s365 = sor.u32 256, 8
        %366 = vbcast.lane.b32.xlu0 %v360, %s365
        %v367 = vpop.permute.xlu0 %366
        %v368 = vlaneseq
        %v369 = vshrl.u32 %v368, 7
        %v370 = vsub.s32 2, %v369
        %v371 = vrot.slane %v345, %v370
        %373 = vbcast.lane.b32.xlu0 %v371, 256
        %v374 = vpop.permute.xlu0 %373
        %s376 = sor.u32 256, 8
        %377 = vbcast.lane.b32.xlu0 %v371, %s376
        %v378 = vpop.permute.xlu0 %377
        %v379 = vlaneseq
        %v380 = vshrl.u32 %v379, 7
        %v381 = vsub.s32 3, %v380
        %v382 = vrot.slane %v345, %v381
        %384 = vbcast.lane.b32.xlu0 %v382, 256
        %v385 = vpop.permute.xlu0 %384
        %s387 = sor.u32 256, 8
        %388 = vbcast.lane.b32.xlu0 %v382, %s387
        %v389 = vpop.permute.xlu0 %388
        %v390 = vlaneseq
        %v391 = vshrl.u32 %v390, 7
        %v392 = vsub.s32 4, %v391
        %v393 = vrot.slane %v345, %v392
        %395 = vbcast.lane.b32.xlu0 %v393, 256
        %v396 = vpop.permute.xlu0 %395
        %s398 = sor.u32 256, 8
        %399 = vbcast.lane.b32.xlu0 %v393, %s398
        %v400 = vpop.permute.xlu0 %399
        %v401 = vlaneseq
        %v402 = vshrl.u32 %v401, 7
        %v403 = vsub.s32 5, %v402
        %v404 = vrot.slane %v345, %v403
        %406 = vbcast.lane.b32.xlu0 %v404, 256
        %v407 = vpop.permute.xlu0 %406
        %s409 = sor.u32 256, 8
        %410 = vbcast.lane.b32.xlu0 %v404, %s409
        %v411 = vpop.permute.xlu0 %410
        %v412 = vlaneseq
        %v413 = vshrl.u32 %v412, 7
        %v414 = vsub.s32 6, %v413
        %v415 = vrot.slane %v345, %v414
        %417 = vbcast.lane.b32.xlu0 %v415, 256
        %v418 = vpop.permute.xlu0 %417
        %s420 = sor.u32 256, 8
        %421 = vbcast.lane.b32.xlu0 %v415, %s420
        %v422 = vpop.permute.xlu0 %421
        %v423 = vlaneseq
        %v424 = vshrl.u32 %v423, 7
        %v425 = vsub.s32 7, %v424
        %v426 = vrot.slane %v345, %v425
        %428 = vbcast.lane.b32.xlu0 %v426, 256
        %v429 = vpop.permute.xlu0 %428
        %s431 = sor.u32 256, 8
        %432 = vbcast.lane.b32.xlu0 %v426, %s431
        %v433 = vpop.permute.xlu0 %432
        %v434 = vunpack.c.l.bf16 %v295
        %v435 = vunpack.c.l.bf16 %v296
        %v436 = vunpack.c.l.bf16 %v297
        %v437 = vunpack.c.l.bf16 %v298
        %v438 = vunpack.c.l.bf16 %v299
        %v439 = vunpack.c.l.bf16 %v300
        %v440 = vunpack.c.l.bf16 %v301
        %v441 = vunpack.c.l.bf16 %v302
        %v442 = vunpack.c.l.bf16 %v303
        %v443 = vunpack.c.l.bf16 %v304
        %v444 = vunpack.c.l.bf16 %v305
        %v445 = vunpack.c.l.bf16 %v306
        %v446 = vunpack.c.l.bf16 %v307
        %v447 = vunpack.c.l.bf16 %v308
        %v448 = vunpack.c.l.bf16 %v309
        %v449 = vunpack.c.l.bf16 %v310
        %v450 = vmul.f32 %v434, %v352
        %v451 = vmul.f32 %v435, %v356
        %v452 = vmul.f32 %v436, %v363
        %v453 = vmul.f32 %v437, %v367
        %v454 = vmul.f32 %v438, %v374
        %v455 = vmul.f32 %v439, %v378
        %v456 = vmul.f32 %v440, %v385
        %v457 = vmul.f32 %v441, %v389
        %v458 = vmul.f32 %v442, %v396
        %v459 = vmul.f32 %v443, %v400
        %v460 = vmul.f32 %v444, %v407
        %v461 = vmul.f32 %v445, %v411
        %v462 = vmul.f32 %v446, %v418
        %v463 = vmul.f32 %v447, %v422
        %v464 = vmul.f32 %v448, %v429
        %v465 = vmul.f32 %v449, %v433
        %v466 = vadd.f32 %v450, %v451
        %v467 = vrot.slane %v466, 4
        %v468 = vadd.f32 %v466, %v467
        %v469 = vrot.slane %v468, 2
        %v470 = vadd.f32 %v468, %v469
        %v471 = vrot.slane %v470, 1
        %v472 = vadd.f32 %v470, %v471
        %v473 = vadd.f32 %v452, %v453
        %v474 = vrot.slane %v473, 4
        %v475 = vadd.f32 %v473, %v474
        %v476 = vrot.slane %v475, 2
        %v477 = vadd.f32 %v475, %v476
        %v478 = vrot.slane %v477, 1
        %v479 = vadd.f32 %v477, %v478
        %v480 = vadd.f32 %v454, %v455
        %v481 = vrot.slane %v480, 4
        %v482 = vadd.f32 %v480, %v481
        %v483 = vrot.slane %v482, 2
        %v484 = vadd.f32 %v482, %v483
        %v485 = vrot.slane %v484, 1
        %v486 = vadd.f32 %v484, %v485
        %v487 = vadd.f32 %v456, %v457
        %v488 = vrot.slane %v487, 4
        %v489 = vadd.f32 %v487, %v488
        %v490 = vrot.slane %v489, 2
        %v491 = vadd.f32 %v489, %v490
        %v492 = vrot.slane %v491, 1
        %v493 = vadd.f32 %v491, %v492
        %v494 = vadd.f32 %v458, %v459
        %v495 = vrot.slane %v494, 4
        %v496 = vadd.f32 %v494, %v495
        %v497 = vrot.slane %v496, 2
        %v498 = vadd.f32 %v496, %v497
        %v499 = vrot.slane %v498, 1
        %v500 = vadd.f32 %v498, %v499
        %v501 = vadd.f32 %v460, %v461
        %v502 = vrot.slane %v501, 4
        %v503 = vadd.f32 %v501, %v502
        %v504 = vrot.slane %v503, 2
        %v505 = vadd.f32 %v503, %v504
        %v506 = vrot.slane %v505, 1
        %v507 = vadd.f32 %v505, %v506
        %v508 = vadd.f32 %v462, %v463
        %v509 = vrot.slane %v508, 4
        %v510 = vadd.f32 %v508, %v509
        %v511 = vrot.slane %v510, 2
        %v512 = vadd.f32 %v510, %v511
        %v513 = vrot.slane %v512, 1
        %v514 = vadd.f32 %v512, %v513
        %v515 = vadd.f32 %v464, %v465
        %v516 = vrot.slane %v515, 4
        %v517 = vadd.f32 %v515, %v516
        %v518 = vrot.slane %v517, 2
        %v519 = vadd.f32 %v517, %v518
        %v520 = vrot.slane %v519, 1
        %v521 = vadd.f32 %v519, %v520
        %vm522 = vcmp.lt.s32.totalorder %v311, 4
        %v523 = vsel %vm522, %v311, 4
        %v524 = vcvt.s32.f32 %v523
        %v525 = vmax.f32 %v524, 1.0
        %v526 = vrcp.pop %v525
        %v527 = vmul.f32 1.0, %v526
        %528 = vset.pattern.permute.xlu0 0
        %529 = vperm.xlu0 %528, %v523
        %v530 = vpop.permute.xlu0 %529
        %vm531 = vcmp.lt.s32.totalorder %v331, %v530
        %533 = vset.pattern.permute.xlu0 0
        %534 = vperm.xlu0 %533, %v527
        %v535 = vpop.permute.xlu0 %534
        %v537 = vsel %vm531, %v535, 0.0
        %v538 = vlaneseq
        %v539 = vshrl.u32 %v538, 7
        %v540 = vsub.s32 0, %v539
        %v541 = vrot.slane %v537, %v540
        %543 = vbcast.lane.b32.xlu0 %v541, 256
        %v544 = vpop.permute.xlu0 %543
        %s546 = sor.u32 256, 8
        %547 = vbcast.lane.b32.xlu0 %v541, %s546
        %v548 = vpop.permute.xlu0 %547
        %v549 = vlaneseq
        %v550 = vshrl.u32 %v549, 7
        %v551 = vsub.s32 1, %v550
        %v552 = vrot.slane %v537, %v551
        %554 = vbcast.lane.b32.xlu0 %v552, 256
        %v555 = vpop.permute.xlu0 %554
        %s557 = sor.u32 256, 8
        %558 = vbcast.lane.b32.xlu0 %v552, %s557
        %v559 = vpop.permute.xlu0 %558
        %v560 = vlaneseq
        %v561 = vshrl.u32 %v560, 7
        %v562 = vsub.s32 2, %v561
        %v563 = vrot.slane %v537, %v562
        %565 = vbcast.lane.b32.xlu0 %v563, 256
        %v566 = vpop.permute.xlu0 %565
        %s568 = sor.u32 256, 8
        %569 = vbcast.lane.b32.xlu0 %v563, %s568
        %v570 = vpop.permute.xlu0 %569
        %v571 = vlaneseq
        %v572 = vshrl.u32 %v571, 7
        %v573 = vsub.s32 3, %v572
        %v574 = vrot.slane %v537, %v573
        %576 = vbcast.lane.b32.xlu0 %v574, 256
        %v577 = vpop.permute.xlu0 %576
        %s579 = sor.u32 256, 8
        %580 = vbcast.lane.b32.xlu0 %v574, %s579
        %v581 = vpop.permute.xlu0 %580
        %v582 = vlaneseq
        %v583 = vshrl.u32 %v582, 7
        %v584 = vsub.s32 4, %v583
        %v585 = vrot.slane %v537, %v584
        %587 = vbcast.lane.b32.xlu0 %v585, 256
        %v588 = vpop.permute.xlu0 %587
        %s590 = sor.u32 256, 8
        %591 = vbcast.lane.b32.xlu0 %v585, %s590
        %v592 = vpop.permute.xlu0 %591
        %v593 = vlaneseq
        %v594 = vshrl.u32 %v593, 7
        %v595 = vsub.s32 5, %v594
        %v596 = vrot.slane %v537, %v595
        %598 = vbcast.lane.b32.xlu0 %v596, 256
        %v599 = vpop.permute.xlu0 %598
        %s601 = sor.u32 256, 8
        %602 = vbcast.lane.b32.xlu0 %v596, %s601
        %v603 = vpop.permute.xlu0 %602
        %v604 = vlaneseq
        %v605 = vshrl.u32 %v604, 7
        %v606 = vsub.s32 6, %v605
        %v607 = vrot.slane %v537, %v606
        %609 = vbcast.lane.b32.xlu0 %v607, 256
        %v610 = vpop.permute.xlu0 %609
        %s612 = sor.u32 256, 8
        %613 = vbcast.lane.b32.xlu0 %v607, %s612
        %v614 = vpop.permute.xlu0 %613
        %v615 = vlaneseq
        %v616 = vshrl.u32 %v615, 7
        %v617 = vsub.s32 7, %v616
        %v618 = vrot.slane %v537, %v617
        %620 = vbcast.lane.b32.xlu0 %v618, 256
        %v621 = vpop.permute.xlu0 %620
        %s623 = sor.u32 256, 8
        %624 = vbcast.lane.b32.xlu0 %v618, %s623
        %v625 = vpop.permute.xlu0 %624
        %v626 = vmul.f32 %v434, %v544
        %v627 = vmul.f32 %v435, %v548
        %v628 = vmul.f32 %v436, %v555
        %v629 = vmul.f32 %v437, %v559
        %v630 = vmul.f32 %v438, %v566
        %v631 = vmul.f32 %v439, %v570
        %v632 = vmul.f32 %v440, %v577
        %v633 = vmul.f32 %v441, %v581
        %v634 = vmul.f32 %v442, %v588
        %v635 = vmul.f32 %v443, %v592
        %v636 = vmul.f32 %v444, %v599
        %v637 = vmul.f32 %v445, %v603
        %v638 = vmul.f32 %v446, %v610
        %v639 = vmul.f32 %v447, %v614
        %v640 = vmul.f32 %v448, %v621
        %v641 = vmul.f32 %v449, %v625
        %v642 = vadd.f32 %v626, %v627
        %v643 = vrot.slane %v642, 4
        %v644 = vadd.f32 %v642, %v643
        %v645 = vrot.slane %v644, 2
        %v646 = vadd.f32 %v644, %v645
        %v647 = vrot.slane %v646, 1
        %v648 = vadd.f32 %v646, %v647
        %v649 = vadd.f32 %v628, %v629
        %v650 = vrot.slane %v649, 4
        %v651 = vadd.f32 %v649, %v650
        %v652 = vrot.slane %v651, 2
        %v653 = vadd.f32 %v651, %v652
        %v654 = vrot.slane %v653, 1
        %v655 = vadd.f32 %v653, %v654
        %v656 = vadd.f32 %v630, %v631
        %v657 = vrot.slane %v656, 4
        %v658 = vadd.f32 %v656, %v657
        %v659 = vrot.slane %v658, 2
        %v660 = vadd.f32 %v658, %v659
        %v661 = vrot.slane %v660, 1
        %v662 = vadd.f32 %v660, %v661
        %v663 = vadd.f32 %v632, %v633
        %v664 = vrot.slane %v663, 4
        %v665 = vadd.f32 %v663, %v664
        %v666 = vrot.slane %v665, 2
        %v667 = vadd.f32 %v665, %v666
        %v668 = vrot.slane %v667, 1
        %v669 = vadd.f32 %v667, %v668
        %v670 = vadd.f32 %v634, %v635
        %v671 = vrot.slane %v670, 4
        %v672 = vadd.f32 %v670, %v671
        %v673 = vrot.slane %v672, 2
        %v674 = vadd.f32 %v672, %v673
        %v675 = vrot.slane %v674, 1
        %v676 = vadd.f32 %v674, %v675
        %v677 = vadd.f32 %v636, %v637
        %v678 = vrot.slane %v677, 4
        %v679 = vadd.f32 %v677, %v678
        %v680 = vrot.slane %v679, 2
        %v681 = vadd.f32 %v679, %v680
        %v682 = vrot.slane %v681, 1
        %v683 = vadd.f32 %v681, %v682
        %v684 = vadd.f32 %v638, %v639
        %v685 = vrot.slane %v684, 4
        %v686 = vadd.f32 %v684, %v685
        %v687 = vrot.slane %v686, 2
        %v688 = vadd.f32 %v686, %v687
        %v689 = vrot.slane %v688, 1
        %v690 = vadd.f32 %v688, %v689
        %v691 = vadd.f32 %v640, %v641
        %v692 = vrot.slane %v691, 4
        %v693 = vadd.f32 %v691, %v692
        %v694 = vrot.slane %v693, 2
        %v695 = vadd.f32 %v693, %v694
        %v696 = vrot.slane %v695, 1
        %v697 = vadd.f32 %v695, %v696
        %vm706 = vcmask 1041409
        %v707 = vsel %vm706, %v479, %v472
        %vm708 = vcmask 1042434
        %v709 = vsel %vm708, %v486, %v707
        %vm710 = vcmask 1043459
        %v711 = vsel %vm710, %v493, %v709
        %vm712 = vcmask 1044484
        %v713 = vsel %vm712, %v500, %v711
        %vm714 = vcmask 1045509
        %v715 = vsel %vm714, %v507, %v713
        %vm716 = vcmask 1046534
        %v717 = vsel %vm716, %v514, %v715
        %vm718 = vcmask 1047559
        %v719 = vsel %vm718, %v521, %v717
        %v729 = vsel %vm706, %v655, %v648
        %v730 = vsel %vm708, %v662, %v729
        %v731 = vsel %vm710, %v669, %v730
        %v732 = vsel %vm712, %v676, %v731
        %v733 = vsel %vm714, %v683, %v732
        %v734 = vsel %vm716, %v690, %v733
        %v735 = vsel %vm718, %v697, %v734
        %v737 = vpack.c.bf16 %v735, %v719
        %v739 = vlaneseq
        %v740 = vshrl.u32 %v739, 7
        %v741 = vsub.s32 0, %v740
        %v742 = vrot.slane %v329, %v741
        %v760 = vunpack.c.l.b16 %v313
        %v761 = vunpack.c.l.b16 %v314
        %v762 = vunpack.c.l.b16 %v315
        %v763 = vunpack.c.l.b16 %v316
        %v764 = vunpack.c.l.b16 %v317
        %v765 = vunpack.c.l.b16 %v318
        %v766 = vunpack.c.l.b16 %v319
        %v767 = vunpack.c.l.b16 %v320
        %v768 = vunpack.c.l.b16 %v321
        %v769 = vunpack.c.l.b16 %v322
        %v770 = vunpack.c.l.b16 %v323
        %v771 = vunpack.c.l.b16 %v324
        %v772 = vunpack.c.l.b16 %v325
        %v773 = vunpack.c.l.b16 %v326
        %v774 = vunpack.c.l.b16 %v327
        %v775 = vunpack.c.l.b16 %v328
        %v776 = vpack.c.b16 %v761, %v760
        %v777 = vpack.c.b16 %v763, %v762
        %v778 = vpack.c.b16 %v765, %v764
        %v779 = vpack.c.b16 %v767, %v766
        %v780 = vpack.c.b16 %v769, %v768
        %v781 = vpack.c.b16 %v771, %v770
        %v782 = vpack.c.b16 %v773, %v772
        %v783 = vpack.c.b16 %v775, %v774
        %792 = vmatprep.subr.bf16.mxu0 0
        %793 = vmatpush1.bf16.msra.mxu0 %v776
        %794 = vmatprep.subr.bf16.mxu0 0
        %795 = vmatpush1.bf16.msra.mxu0 %v777
        %796 = vmatprep.subr.bf16.mxu0 0
        %797 = vmatpush1.bf16.msra.mxu0 %v778
        %798 = vmatprep.subr.bf16.mxu0 0
        %799 = vmatpush1.bf16.msra.mxu0 %v779
        %800 = vmatprep.subr.bf16.mxu0 0
        %801 = vmatpush1.bf16.msra.mxu0 %v780
        %802 = vmatprep.subr.bf16.mxu0 0
        %803 = vmatpush1.bf16.msra.mxu0 %v781
        %804 = vmatprep.subr.bf16.mxu0 0
        %805 = vmatpush1.bf16.msra.mxu0 %v782
        %806 = vmatprep.subr.bf16.mxu0 0
        %807 = vmatpush1.bf16.msra.mxu0 %v783
        %808 = vmatprep.subr.bf16.mxu0 0
        %809 = vmatpush1.bf16.msra.mxu0 0
        %810 = vmatprep.subr.bf16.mxu0 0
        %811 = vmatpush1.bf16.msra.mxu0 0
        %812 = vmatprep.subr.bf16.mxu0 0
        %813 = vmatpush1.bf16.msra.mxu0 0
        %814 = vmatprep.subr.bf16.mxu0 0
        %815 = vmatpush1.bf16.msra.mxu0 0
        %816 = vmatprep.subr.bf16.mxu0 0
        %817 = vmatpush1.bf16.msra.mxu0 0
        %818 = vmatprep.subr.bf16.mxu0 0
        %819 = vmatpush1.bf16.msra.mxu0 0
        %820 = vmatprep.subr.bf16.mxu0 0
        %821 = vmatpush1.bf16.msra.mxu0 0
        %822 = vmatprep.subr.bf16.mxu0 0
        %823 = vmatpush1.bf16.msra.mxu0 0
        %824 = vmatprep.mubr.bf16.mxu0 0
        %825 = vmatmul.mubr.bf16.gmra.mrb[0].mxu0 %v737
        %v826 = vpop.f32.mrb[0].mxu0
        %v827 = vadd.f32 %v742, %v826
        %v828 = vpop.f32.mrb[0].mxu0
        %v829 = vpop.f32.mrb[0].mxu0
        %v830 = vadd.f32 %v742, %v829
        %v831 = vpop.f32.mrb[0].mxu0
        %832 = vdwg.mxu0
        %833 = vmax.xlane.f32.xlu0 %v827
        %v834 = vpop.xlane.xlu0 %833
        %835 = vmax.xlane.f32.xlu0 %v830
        %v836 = vpop.xlane.xlu0 %835
        %v837 = vsub.f32 %v827, %v834
        %v838 = vsub.f32 %v830, %v836
        %v839 = vmul.f32 %v837, 1.442695
        %v840 = vpow.pop %v839
        %v841 = vmul.f32 %v838, 1.442695
        %v842 = vpow.pop %v841
        %843 = vadd.xlane.f32.xlu0 %v840
        %v844 = vpop.xlane.xlu0 %843
        %845 = vadd.xlane.f32.xlu0 %v842
        %v846 = vpop.xlane.xlu0 %845
        %v847 = vrcp.pop %v844
        %v848 = vmul.f32 %v840, %v847
        %vm849 = vcmp.ge.f32.partialorder %v827, %v834
        %v850 = vsel %vm849, %v331, 128
        %v851 = vand.u32 %v850, 65535
        %v852 = vshra.s32 %v850, 16
        %v853 = vcvt.s32.f32 %v851
        %v854 = vcvt.s32.f32 %v852
        %855 = vmin.xlane.f32.xlu0 %v854
        %v856 = vpop.xlane.xlu0 %855
        %vm857 = vcmp.eq.f32.partialorder %v854, %v856
        %v858 = vsel %vm857, %v853, inf
        %859 = vmin.xlane.f32.xlu0 %v858
        %v860 = vpop.xlane.xlu0 %859
        %v861 = vcvt.f32.s32 %v860
        %v862 = vcvt.f32.s32 %v856
        %v863 = vshll.u32 %v862, 16
        %v864 = vadd.s32 %v863, %v861
        %865 = vset.pattern.permute.xlu0 0
        %866 = vperm.xlu0 %865, %v312
        %v867 = vpop.permute.xlu0 %866
        %vm868 = vcmp.eq.s32.totalorder %v331, %v867
        %v869 = vsel %vm868, %v848, 0.0
        %870 = vadd.xlane.f32.xlu0 %v869
        %v871 = vpop.xlane.xlu0 %870
        %v872 = vsel %vm868, %v842, 0.0
        %873 = vadd.xlane.f32.xlu0 %v872
        %v874 = vpop.xlane.xlu0 %873
        %v875 = vrcp.pop %v846
        %v876 = vmul.f32 %v874, %v875
        %vm877 = vcmp.eq.s32.totalorder %v864, %v312
        %v878 = vsub.f32 %v871, %v876
        %vm879 = vcmp.lt.f32.partialorder %v878, 0.1
        %vm880 = vmand %vm877, %vm879
        %v881 = vsel %vm880, 1, 0
        %v882 = vcvt.s32.f32 %v881
        %vm883 = vcmp.lt.s32.totalorder %v331, 3
        %v884 = vsel %vm883, %v848, 0.0
        %vm885 = vcmp.eq.s32.totalorder %v331, 3
        %v886 = vcvt.s32.f32 %v864
        %v887 = vsel %vm885, %v886, 0.0
        %v888 = vadd.f32 %v884, %v887
        %vm889 = vcmp.eq.s32.totalorder %v331, 4
        %v890 = vsel %vm889, %v871, 0.0
        %v891 = vadd.f32 %v888, %v890
        %vm892 = vcmp.eq.s32.totalorder %v331, 5
        %v893 = vsel %vm892, %v876, 0.0
        %v894 = vadd.f32 %v891, %v893
        %vm895 = vcmp.eq.s32.totalorder %v331, 6
        %897 = vset.pattern.permute.xlu0 0
        %898 = vperm.xlu0 %897, %v882
        %v899 = vpop.permute.xlu0 %898
        %v901 = vsel %vm895, %v899, 0.0
        %v902 = vadd.f32 %v894, %v901
        %903 = vst [vmem:[%s284] sm:$0xff] %v902
        %s904 = sand.u32 %s151, 1
        %s905 = scalar_lea.sflag [#allocation4], %s904
        %s906 = sand.u32 %s151, 1
        %s907 = smul.addr %s906, 8
        %s908 = scalar_lea.vmem [#allocation7], %s907
        // Predicated region
        $region49: #{tpu_custom_call.1} parent=39 // pred_check
          %p909 = pneg %p161
        $region50: #{tpu_custom_call.1} parent=39 // pred_check_branch
          %911 = sbr.rel (%p909) target = $region52
        $region51: #{tpu_custom_call.1} parent=39 // pred_region
          %s913 = ssub.s32 128, 128
          %914 = vsyncadd %s905, %s913
          %s915 = smul.addr %s23, 128
          %s916 = scalar_lea.hbm %s5, %s915
          %s918 = sshll.u32 %s908, 4
          %s919 = int_to_ptr.vmem [resolvable:$true] %s918
          %921 = dma.vmem_to_hbm [thread:$0]  %s919, 128, %s916, %s905
        $region52: #{tpu_custom_call.1} parent=39 // pred_fallthru
          _
      $region40: #{tpu_custom_call.1} parent=5 // pred_fallthru
        _
      %p922 = scmp.le.s32.totalorder 2, %s18
      // Predicated region
      $region53: #{tpu_custom_call.1} parent=5 // pred_check
        %p923 = pneg %p922
      $region54: #{tpu_custom_call.1} parent=5 // pred_check_branch
        %925 = sbr.rel (%p923) target = $region56
      $region55: #{tpu_custom_call.1} parent=5 // pred_region
        %s926 = ssub.s32 %s18, 2
        // Predicated region
        $region57: #{tpu_custom_call.1} parent=55 // pred_check
          %p927 = pneg %p167
        $region58: #{tpu_custom_call.1} parent=55 // pred_check_branch
          %929 = sbr.rel (%p927) target = $region60
        $region59: #{tpu_custom_call.1} parent=55 // pred_region
          %s930 = sand.u32 %s152, 1
          %s931 = scalar_lea.sflag [#allocation4], %s930
          %s932 = sand.u32 %s152, 1
          %s933 = smul.addr %s932, 8
          %s934 = scalar_lea.vmem [#allocation7], %s933
          %935 = dma.done %s931, 128
        $region60: #{tpu_custom_call.1} parent=55 // pred_fallthru
          _
      $region56: #{tpu_custom_call.1} parent=5 // pred_fallthru
        _
    $region6: #{tpu_custom_call.1} parent=1 // loop_footer
      %s22 = sadd.s32 1, %s18
    $region7: #{tpu_custom_call.1} parent=1 // loop_footer_branch
      %17 = sbr.rel target = $region3
    $region8: #{tpu_custom_call.1} parent=1 // loop_exit
      _
    %936 = vsyncpa [#allocation3], 1
    %s937 = scalar_lea.sflag [#allocation3], 1
    %938 = vsyncpa %s937, 1
    %939 = vsyncpa [#allocation6], 1
    %940 = vsyncpa [#allocation4], 1
    %s941 = scalar_lea.sflag [#allocation4], 1
    %942 = vsyncpa %s941, 1

</llo_original>
